<compile_context>
chip_gen: v7x
topology: tpu7x:2x2x1
jax: 0.10.0
libtpu: 0.0.40
codegen_flags: <defaults>
</compile_context>

<pallas_src>
import functools

import jax
import jax.numpy as jnp
from jax.experimental import pallas as pl
from jax.experimental.pallas import tpu as pltpu

LN_EPS = 1e-5
LANE = 128
H1_PAD = 512   # 400 -> 512 (lane aligned)
H2_PAD = 384   # 300 -> 384 (lane aligned)


def _round_up(x, m):
    return ((x + m - 1) // m) * m


# --------------------------------------------------------------------------- kernel
def actor_kernel(x_ref, g_ref, be_ref,
                 w1_ref, b1_ref, w2_ref, b2_ref, w3_ref, b3_ref,
                 out_ref):
    # ---- LayerNorm (f32), single reduction pass: var = E[x^2] - E[x]^2 ----
    x = x_ref[...]                                   # [TB, S] f32
    inv_d = jnp.float32(1.0 / x.shape[-1])
    s1 = jnp.sum(x, axis=-1, keepdims=True)
    s2 = jnp.sum(x * x, axis=-1, keepdims=True)
    mean = s1 * inv_d
    var = s2 * inv_d - mean * mean
    scale = jax.lax.rsqrt(var + LN_EPS)              # [TB, 1]
    a = (x - mean) * (scale * g_ref[...]) + be_ref[...]
    a = jnp.maximum(a, 0.0).astype(w1_ref.dtype)     # bf16 for the MXU

    # ---- l1: Linear(S, 512pad) + ReLU ----
    h1 = jnp.dot(a, w1_ref[...], preferred_element_type=jnp.float32) + b1_ref[...]
    h1 = jnp.maximum(h1, 0.0).astype(w2_ref.dtype)

    # ---- l2: Linear(512pad, 384pad) + ReLU ----
    h2 = jnp.dot(h1, w2_ref[...], preferred_element_type=jnp.float32) + b2_ref[...]
    h2 = jnp.maximum(h2, 0.0).astype(w3_ref.dtype)

    # ---- l3: Linear(384pad, 128pad) ----
    y = jnp.dot(h2, w3_ref[...], preferred_element_type=jnp.float32) + b3_ref[...]
    out_ref[...] = y.astype(out_ref.dtype)           # lane-dense [TB, 128] store


# ------------------------------------------------------------------- param plumbing
def _prepare_params(params, compute_dtype):
    """Zero-pad weights/biases to lane-aligned shapes; cast matmul weights to bf16."""
    S = params["w1"].shape[0]
    A = params["w3"].shape[1]
    out_pad = _round_up(A, LANE)

    def pad2(w, r, c):
        return jnp.pad(w, ((0, r - w.shape[0]), (0, c - w.shape[1])))

    return dict(
        ln_g=params["ln_g"].astype(jnp.float32),
        ln_b=params["ln_b"].astype(jnp.float32),
        w1=pad2(params["w1"], S, H1_PAD).astype(compute_dtype),
        b1=pad2(params["b1"], 1, H1_PAD).astype(jnp.float32),       # zero-padded cols
        w2=pad2(params["w2"], H1_PAD, H2_PAD).astype(compute_dtype),
        b2=pad2(params["b2"], 1, H2_PAD).astype(jnp.float32),
        w3=pad2(params["w3"], H2_PAD, out_pad).astype(compute_dtype),
        b3=pad2(params["b3"], 1, out_pad).astype(jnp.float32),
    )


# -------------------------------------------------------------------------- wrapper
@functools.partial(jax.jit, static_argnames=("block_b", "compute_dtype"))
def actor_forward(x, params, *, block_b=256, compute_dtype=jnp.bfloat16):
    """x: [B, state_dim] float32.  params: dict from init_params."""
    B, S = x.shape
    action_dim = params["w3"].shape[1]

    p = _prepare_params(params, compute_dtype)
    out_pad = p["w3"].shape[1]

    # Batch tile: multiple of 8 sublanes, up to block_b; pad batch to a whole grid.
    tb = min(block_b, _round_up(max(B, 8), 8))
    b_pad = _round_up(B, tb)
    if b_pad != B:
        x = jnp.pad(x, ((0, b_pad - B), (0, 0)))
    grid = (b_pad // tb,)

    def resident(shape):                              # weights: same block every step
        return pl.BlockSpec(shape, lambda i: (0, 0))

    in_specs = [
        pl.BlockSpec((tb, S), lambda i: (i, 0)),      # streamed activation tile
        resident((1, S)), resident((1, S)),           # LayerNorm gamma / beta
        resident((S, H1_PAD)), resident((1, H1_PAD)),
        resident((H1_PAD, H2_PAD)), resident((1, H2_PAD)),
        resident((H2_PAD, out_pad)), resident((1, out_pad)),
    ]
    out_specs = pl.BlockSpec((tb, out_pad), lambda i: (i, 0))

    flops = 2 * b_pad * (S * 400 + 400 * 300 + 300 * action_dim)
    bytes_accessed = (b_pad * S * 4
                      + sum(int(v.size) * v.dtype.itemsize for v in p.values())
                      + b_pad * out_pad * 4)

    out = pl.pallas_call(
        actor_kernel,
        out_shape=jax.ShapeDtypeStruct((b_pad, out_pad), jnp.float32),
        grid=grid,
        in_specs=in_specs,
        out_specs=out_specs,
        compiler_params=pltpu.CompilerParams(
            dimension_semantics=("parallel",),
            vmem_limit_bytes=32 * 1024 * 1024,
        ),
        cost_estimate=pl.CostEstimate(
            flops=flops, transcendentals=b_pad, bytes_accessed=bytes_accessed),
    )(x, p["ln_g"], p["ln_b"],
      p["w1"], p["b1"], p["w2"], p["b2"], p["w3"], p["b3"])

    # Drop batch padding and the padded output lanes.
    return out[:B, :action_dim]


# ----------------------------------------------------------------- init / reference
def init_params(key, state_dim, action_dim):
    """Deterministic synthetic parameters (PyTorch-Linear-style uniform init)."""
    ks = jax.random.split(key, 6)

    def linear_init(kw, kb, fan_in, fan_out):
        bound = 1.0 / jnp.sqrt(jnp.float32(fan_in))
        w = jax.random.uniform(kw, (fan_in, fan_out), jnp.float32, -bound, bound)
        b = jax.random.uniform(kb, (1, fan_out), jnp.float32, -bound, bound)
        return w, b

    w1, b1 = linear_init(ks[0], ks[1], state_dim, 400)
    w2, b2 = linear_init(ks[2], ks[3], 400, 300)
    w3, b3 = linear_init(ks[4], ks[5], 300, action_dim)
    return {
        "ln_g": jnp.ones((1, state_dim), jnp.float32),   # LayerNorm weight (default 1)
        "ln_b": jnp.zeros((1, state_dim), jnp.float32),  # LayerNorm bias   (default 0)
        "w1": w1, "b1": b1,
        "w2": w2, "b2": b2,
        "w3": w3, "b3": b3,
    }


def actor_reference(x, params):
    """Pure-JAX f32 reference matching the PyTorch forward."""
    mean = jnp.mean(x, axis=-1, keepdims=True)
    var = jnp.mean((x - mean) ** 2, axis=-1, keepdims=True)
    a = (x - mean) * jax.lax.rsqrt(var + LN_EPS) * params["ln_g"] + params["ln_b"]
    a = jax.nn.relu(a)
    a = jax.nn.relu(a @ params["w1"] + params["b1"])
    a = jax.nn.relu(a @ params["w2"] + params["b2"])
    return a @ params["w3"] + params["b3"]


if __name__ == "__main__":
    key = jax.random.PRNGKey(0)
    k_x, k_p, k_x2 = jax.random.split(key, 3)

    batch, state_dim, action_dim, max_action = 8, 32, 8, 1.0  # max_action unused in fwd
    params = init_params(k_p, state_dim, action_dim)

    # Small-batch case (single grid step).
    x = jax.random.normal(k_x, (batch, state_dim), jnp.float32)
    out = jax.block_until_ready(actor_forward(x, params))
    ref = actor_reference(x, params)
    assert out.shape == (batch, action_dim)
    err = float(jnp.max(jnp.abs(out - ref)))
    assert jnp.allclose(out, ref, atol=3e-2, rtol=3e-2), f"mismatch vs reference (max abs err {err})"

    # Larger batch exercising the batch grid (two 256-row tiles, pipelined).
    x2 = jax.random.normal(k_x2, (512, state_dim), jnp.float32)
    out2 = jax.block_until_ready(actor_forward(x2, params))
    ref2 = actor_reference(x2, params)
    assert out2.shape == (512, action_dim)
    assert jnp.allclose(out2, ref2, atol=3e-2, rtol=3e-2), "mismatch vs reference (batched)"

    print("KERNEL_OK")
</pallas_src>

<mosaic_0001>
module attributes {stable_mosaic.version = 11 : i64} {
  func.func @actor_kernel(%arg0: i32, %arg1: memref<8x32xf32, #tpu.memory_space<vmem>>, %arg2: memref<1x32xf32, #tpu.memory_space<vmem>>, %arg3: memref<1x32xf32, #tpu.memory_space<vmem>>, %arg4: memref<32x512xbf16, #tpu.memory_space<vmem>>, %arg5: memref<1x512xf32, #tpu.memory_space<vmem>>, %arg6: memref<512x384xbf16, #tpu.memory_space<vmem>>, %arg7: memref<1x384xf32, #tpu.memory_space<vmem>>, %arg8: memref<384x128xbf16, #tpu.memory_space<vmem>>, %arg9: memref<1x128xf32, #tpu.memory_space<vmem>>, %arg10: memref<8x128xf32, #tpu.memory_space<vmem>>) attributes {dimension_semantics = [#tpu.dimension_semantics<parallel>], iteration_bounds = array<i64: 1>, scalar_prefetch = 0 : i64, scratch_operands = 0 : i64, tpu.core_type = #tpu.core_type<tc>, window_params = [{transform_indices = @transform_0, window_bounds = array<i64: 8, 32>}, {pipeline_mode = #tpu.pipeline_mode<synchronous>, transform_indices = @transform_1, window_bounds = array<i64: 1, 32>}, {pipeline_mode = #tpu.pipeline_mode<synchronous>, transform_indices = @transform_2, window_bounds = array<i64: 1, 32>}, {pipeline_mode = #tpu.pipeline_mode<synchronous>, transform_indices = @transform_3, window_bounds = array<i64: 32, 512>}, {pipeline_mode = #tpu.pipeline_mode<synchronous>, transform_indices = @transform_4, window_bounds = array<i64: 1, 512>}, {pipeline_mode = #tpu.pipeline_mode<synchronous>, transform_indices = @transform_5, window_bounds = array<i64: 512, 384>}, {pipeline_mode = #tpu.pipeline_mode<synchronous>, transform_indices = @transform_6, window_bounds = array<i64: 1, 384>}, {pipeline_mode = #tpu.pipeline_mode<synchronous>, transform_indices = @transform_7, window_bounds = array<i64: 384, 128>}, {pipeline_mode = #tpu.pipeline_mode<synchronous>, transform_indices = @transform_8, window_bounds = array<i64: 1, 128>}, {transform_indices = @transform_9, window_bounds = array<i64: 8, 128>}]} {
    %c0 = arith.constant 0 : index
    %c0_0 = arith.constant 0 : index
    %0 = vector.load %arg1[%c0, %c0_0] : memref<8x32xf32, #tpu.memory_space<vmem>>, vector<8x32xf32>
    %cst = arith.constant dense<0.000000e+00> : vector<8xf32>
    %1 = vector.multi_reduction <add>, %0, %cst [1] : vector<8x32xf32> to vector<8xf32>
    %2 = vector.shape_cast %1 : vector<8xf32> to vector<8x1xf32>
    %3 = arith.mulf %0, %0 : vector<8x32xf32>
    %cst_1 = arith.constant dense<0.000000e+00> : vector<8xf32>
    %4 = vector.multi_reduction <add>, %3, %cst_1 [1] : vector<8x32xf32> to vector<8xf32>
    %5 = vector.shape_cast %4 : vector<8xf32> to vector<8x1xf32>
    %cst_2 = arith.constant 3.125000e-02 : f32
    %6 = vector.broadcast %cst_2 : f32 to vector<8x1xf32>
    %7 = arith.mulf %2, %6 : vector<8x1xf32>
    %cst_3 = arith.constant 3.125000e-02 : f32
    %8 = vector.broadcast %cst_3 : f32 to vector<8x1xf32>
    %9 = arith.mulf %5, %8 : vector<8x1xf32>
    %10 = arith.mulf %7, %7 : vector<8x1xf32>
    %11 = arith.subf %9, %10 : vector<8x1xf32>
    %cst_4 = arith.constant 9.99999974E-6 : f32
    %12 = vector.broadcast %cst_4 : f32 to vector<8x1xf32>
    %13 = arith.addf %11, %12 : vector<8x1xf32>
    %14 = math.rsqrt %13 : vector<8x1xf32>
    %15 = vector.broadcast %7 : vector<8x1xf32> to vector<8x32xf32>
    %16 = arith.subf %0, %15 : vector<8x32xf32>
    %c0_5 = arith.constant 0 : index
    %c0_6 = arith.constant 0 : index
    %17 = vector.load %arg2[%c0_5, %c0_6] : memref<1x32xf32, #tpu.memory_space<vmem>>, vector<1x32xf32>
    %18 = vector.broadcast %14 : vector<8x1xf32> to vector<8x32xf32>
    %19 = vector.broadcast %17 : vector<1x32xf32> to vector<8x32xf32>
    %20 = arith.mulf %18, %19 : vector<8x32xf32>
    %21 = arith.mulf %16, %20 : vector<8x32xf32>
    %c0_7 = arith.constant 0 : index
    %c0_8 = arith.constant 0 : index
    %22 = vector.load %arg3[%c0_7, %c0_8] : memref<1x32xf32, #tpu.memory_space<vmem>>, vector<1x32xf32>
    %23 = vector.broadcast %22 : vector<1x32xf32> to vector<8x32xf32>
    %24 = arith.addf %21, %23 : vector<8x32xf32>
    %cst_9 = arith.constant 0.000000e+00 : f32
    %25 = vector.broadcast %cst_9 : f32 to vector<8x32xf32>
    %26 = arith.maximumf %24, %25 : vector<8x32xf32>
    %27 = arith.truncf %26 : vector<8x32xf32> to vector<8x32xbf16>
    %c0_10 = arith.constant 0 : index
    %c0_11 = arith.constant 0 : index
    %28 = vector.load %arg4[%c0_10, %c0_11] : memref<32x512xbf16, #tpu.memory_space<vmem>>, vector<32x512xbf16>
    %cst_12 = arith.constant dense<0.000000e+00> : vector<8x512xf32>
    %29 = tpu.matmul %27, %28, %cst_12 {dimension_numbers = #tpu.dot_dimension_numbers<[1], [0], [0], [1], [0, 0, 1, 1], [], []>} : vector<8x32xbf16>, vector<32x512xbf16>, vector<8x512xf32> -> vector<8x512xf32>
    %c0_13 = arith.constant 0 : index
    %c0_14 = arith.constant 0 : index
    %30 = vector.load %arg5[%c0_13, %c0_14] : memref<1x512xf32, #tpu.memory_space<vmem>>, vector<1x512xf32>
    %31 = vector.broadcast %30 : vector<1x512xf32> to vector<8x512xf32>
    %32 = arith.addf %29, %31 : vector<8x512xf32>
    %cst_15 = arith.constant 0.000000e+00 : f32
    %33 = vector.broadcast %cst_15 : f32 to vector<8x512xf32>
    %34 = arith.maximumf %32, %33 : vector<8x512xf32>
    %35 = arith.truncf %34 : vector<8x512xf32> to vector<8x512xbf16>
    %c0_16 = arith.constant 0 : index
    %c0_17 = arith.constant 0 : index
    %36 = vector.load %arg6[%c0_16, %c0_17] : memref<512x384xbf16, #tpu.memory_space<vmem>>, vector<512x384xbf16>
    %cst_18 = arith.constant dense<0.000000e+00> : vector<8x384xf32>
    %37 = tpu.matmul %35, %36, %cst_18 {dimension_numbers = #tpu.dot_dimension_numbers<[1], [0], [0], [1], [0, 0, 1, 1], [], []>} : vector<8x512xbf16>, vector<512x384xbf16>, vector<8x384xf32> -> vector<8x384xf32>
    %c0_19 = arith.constant 0 : index
    %c0_20 = arith.constant 0 : index
    %38 = vector.load %arg7[%c0_19, %c0_20] : memref<1x384xf32, #tpu.memory_space<vmem>>, vector<1x384xf32>
    %39 = vector.broadcast %38 : vector<1x384xf32> to vector<8x384xf32>
    %40 = arith.addf %37, %39 : vector<8x384xf32>
    %cst_21 = arith.constant 0.000000e+00 : f32
    %41 = vector.broadcast %cst_21 : f32 to vector<8x384xf32>
    %42 = arith.maximumf %40, %41 : vector<8x384xf32>
    %43 = arith.truncf %42 : vector<8x384xf32> to vector<8x384xbf16>
    %c0_22 = arith.constant 0 : index
    %c0_23 = arith.constant 0 : index
    %44 = vector.load %arg8[%c0_22, %c0_23] : memref<384x128xbf16, #tpu.memory_space<vmem>>, vector<384x128xbf16>
    %cst_24 = arith.constant dense<0.000000e+00> : vector<8x128xf32>
    %45 = tpu.matmul %43, %44, %cst_24 {dimension_numbers = #tpu.dot_dimension_numbers<[1], [0], [0], [1], [0, 0, 1, 1], [], []>} : vector<8x384xbf16>, vector<384x128xbf16>, vector<8x128xf32> -> vector<8x128xf32>
    %c0_25 = arith.constant 0 : index
    %c0_26 = arith.constant 0 : index
    %46 = vector.load %arg9[%c0_25, %c0_26] : memref<1x128xf32, #tpu.memory_space<vmem>>, vector<1x128xf32>
    %47 = vector.broadcast %46 : vector<1x128xf32> to vector<8x128xf32>
    %48 = arith.addf %45, %47 : vector<8x128xf32>
    %c0_27 = arith.constant 0 : index
    %c0_28 = arith.constant 0 : index
    %49 = vector.load %arg10[%c0_27, %c0_28] : memref<8x128xf32, #tpu.memory_space<vmem>>, vector<8x128xf32>
    tpu.vector_store %arg10[%c0_27, %c0_28], %48 {strides = array<i32>} : memref<8x128xf32, #tpu.memory_space<vmem>>, vector<8x128xf32>,
    return
  }
  func.func @transform_0(%arg0: i32) -> (i32, i32) {
    %c0_i32 = arith.constant 0 : i32
    %c0_i32_0 = arith.constant 0 : i32
    return %arg0, %c0_i32 : i32, i32
  }
  func.func @transform_1(%arg0: i32) -> (i32, i32) {
    %c0_i32 = arith.constant 0 : i32
    %c0_i32_0 = arith.constant 0 : i32
    %c0_i32_1 = arith.constant 0 : i32
    return %c0_i32, %c0_i32_0 : i32, i32
  }
  func.func @transform_2(%arg0: i32) -> (i32, i32) {
    %c0_i32 = arith.constant 0 : i32
    %c0_i32_0 = arith.constant 0 : i32
    %c0_i32_1 = arith.constant 0 : i32
    return %c0_i32, %c0_i32_0 : i32, i32
  }
  func.func @transform_3(%arg0: i32) -> (i32, i32) {
    %c0_i32 = arith.constant 0 : i32
    %c0_i32_0 = arith.constant 0 : i32
    %c0_i32_1 = arith.constant 0 : i32
    return %c0_i32, %c0_i32_0 : i32, i32
  }
  func.func @transform_4(%arg0: i32) -> (i32, i32) {
    %c0_i32 = arith.constant 0 : i32
    %c0_i32_0 = arith.constant 0 : i32
    %c0_i32_1 = arith.constant 0 : i32
    return %c0_i32, %c0_i32_0 : i32, i32
  }
  func.func @transform_5(%arg0: i32) -> (i32, i32) {
    %c0_i32 = arith.constant 0 : i32
    %c0_i32_0 = arith.constant 0 : i32
    %c0_i32_1 = arith.constant 0 : i32
    return %c0_i32, %c0_i32_0 : i32, i32
  }
  func.func @transform_6(%arg0: i32) -> (i32, i32) {
    %c0_i32 = arith.constant 0 : i32
    %c0_i32_0 = arith.constant 0 : i32
    %c0_i32_1 = arith.constant 0 : i32
    return %c0_i32, %c0_i32_0 : i32, i32
  }
  func.func @transform_7(%arg0: i32) -> (i32, i32) {
    %c0_i32 = arith.constant 0 : i32
    %c0_i32_0 = arith.constant 0 : i32
    %c0_i32_1 = arith.constant 0 : i32
    return %c0_i32, %c0_i32_0 : i32, i32
  }
  func.func @transform_8(%arg0: i32) -> (i32, i32) {
    %c0_i32 = arith.constant 0 : i32
    %c0_i32_0 = arith.constant 0 : i32
    %c0_i32_1 = arith.constant 0 : i32
    return %c0_i32, %c0_i32_0 : i32, i32
  }
  func.func @transform_9(%arg0: i32) -> (i32, i32) {
    %c0_i32 = arith.constant 0 : i32
    %c0_i32_0 = arith.constant 0 : i32
    return %arg0, %c0_i32 : i32, i32
  }
}

</mosaic_0001>

<llo_original>
// kernel: actor_forward.1
$region0: #{actor_forward.1}
  #allocation0 [shape = 'u32[]', space=smem, size = 0x4, offset = 0x4, fixed_abs, tag = 'smem constant byte address 0x4 - core index']
  #allocation1 [shape = 'u32[144,128]{1,0:T(1,128)}', space=vmem, size = 0x12000, scoped, tag = 'internal scratch']
  %s0 = inlined_call_operand.vmem [shape: f32[8,32], index: 0, kind: input, shape index: {}]
  %s1 = inlined_call_operand.vmem [shape: f32[1,32], index: 1, kind: input, shape index: {}]
  %s2 = inlined_call_operand.vmem [shape: f32[1,32], index: 2, kind: input, shape index: {}]
  %s3 = inlined_call_operand.vmem [shape: bf16[32,512], index: 3, kind: input, shape index: {}]
  %s4 = inlined_call_operand.vmem [shape: f32[1,512], index: 4, kind: input, shape index: {}]
  %s5 = inlined_call_operand.vmem [shape: bf16[512,384], index: 5, kind: input, shape index: {}]
  %s6 = inlined_call_operand.vmem [shape: f32[1,384], index: 6, kind: input, shape index: {}]
  %s7 = inlined_call_operand.vmem [shape: bf16[384,128], index: 7, kind: input, shape index: {}]
  %s8 = inlined_call_operand.vmem [shape: f32[1,128], index: 8, kind: input, shape index: {}]
  %s9 = inlined_call_operand.hbm [shape: f32[8,128], index: 9, kind: output, shape index: {}]
  %s10 = sld [smem:[#allocation0]]
  $region46: #{actor_forward.1} parent=0
    _
  %s12 = ssub.s32 1, %s10
  %s13 = scalar_select 0, %s12, %s10
  $region1: #{actor_forward.1} parent=0
    #allocation2 [shape = 'u8[4096]{0}', space=vmem, size = 0x1000, scoped, tag = 'output window, operand 0, single buffered']
    #allocation3 [shape = 's32[1]{0}', space=sflag, size = 0x4, scoped, tag = 'scoped memory for actor_forward.1']
    %14 = vsyncpa [#allocation3], 0
    // Predicated region
    $region2: #{actor_forward.1} parent=1 // pred_check
      _
    $region3: #{actor_forward.1} parent=1 // pred_check_branch
      %16 = sbr.rel (0) target = $region5
    $region4: #{actor_forward.1} parent=1 // pred_region
      _
    $region5: #{actor_forward.1} parent=1 // pred_fallthru
      _
    // Predicated region
    $region6: #{actor_forward.1} parent=1 // pred_check
      _
    $region7: #{actor_forward.1} parent=1 // pred_check_branch
      %18 = sbr.rel (0) target = $region9
    $region8: #{actor_forward.1} parent=1 // pred_region
      _
    $region9: #{actor_forward.1} parent=1 // pred_fallthru
      _
    // Predicated region
    $region10: #{actor_forward.1} parent=1 // pred_check
      _
    $region11: #{actor_forward.1} parent=1 // pred_check_branch
      %20 = sbr.rel (0) target = $region13
    $region12: #{actor_forward.1} parent=1 // pred_region
      _
    $region13: #{actor_forward.1} parent=1 // pred_fallthru
      _
    // Predicated region
    $region14: #{actor_forward.1} parent=1 // pred_check
      _
    $region15: #{actor_forward.1} parent=1 // pred_check_branch
      %22 = sbr.rel (0) target = $region17
    $region16: #{actor_forward.1} parent=1 // pred_region
      _
    $region17: #{actor_forward.1} parent=1 // pred_fallthru
      _
    // Predicated region
    $region18: #{actor_forward.1} parent=1 // pred_check
      _
    $region19: #{actor_forward.1} parent=1 // pred_check_branch
      %24 = sbr.rel (0) target = $region21
    $region20: #{actor_forward.1} parent=1 // pred_region
      _
    $region21: #{actor_forward.1} parent=1 // pred_fallthru
      _
    // Predicated region
    $region22: #{actor_forward.1} parent=1 // pred_check
      _
    $region23: #{actor_forward.1} parent=1 // pred_check_branch
      %26 = sbr.rel (0) target = $region25
    $region24: #{actor_forward.1} parent=1 // pred_region
      _
    $region25: #{actor_forward.1} parent=1 // pred_fallthru
      _
    // Predicated region
    $region26: #{actor_forward.1} parent=1 // pred_check
      _
    $region27: #{actor_forward.1} parent=1 // pred_check_branch
      %28 = sbr.rel (0) target = $region29
    $region28: #{actor_forward.1} parent=1 // pred_region
      _
    $region29: #{actor_forward.1} parent=1 // pred_fallthru
      _
    // Predicated region
    $region30: #{actor_forward.1} parent=1 // pred_check
      _
    $region31: #{actor_forward.1} parent=1 // pred_check_branch
      %30 = sbr.rel (0) target = $region33
    $region32: #{actor_forward.1} parent=1 // pred_region
      _
    $region33: #{actor_forward.1} parent=1 // pred_fallthru
      _
    // Predicated region
    $region34: #{actor_forward.1} parent=1 // pred_check
      _
    $region35: #{actor_forward.1} parent=1 // pred_check_branch
      %32 = sbr.rel (0) target = $region37
    $region36: #{actor_forward.1} parent=1 // pred_region
      _
    $region37: #{actor_forward.1} parent=1 // pred_fallthru
      _
    %v34 = vld [vmem:[%s0] sm:$0xff]
    %vm35 = vcmask 261120
    %v36 = vsel %vm35, %v34, 0.0
    %37 = vadd.xlane.f32.xlu0 %v36
    %v38 = vpop.xlane.xlu0 %37
    %v39 = vmul.f32 %v34, %v34
    %v40 = vsel %vm35, %v39, 0.0
    %41 = vadd.xlane.f32.xlu0 %v40
    %v42 = vpop.xlane.xlu0 %41
    %v43 = vmul.f32 %v38, 0.03125
    %v44 = vmul.f32 %v42, 0.03125
    %v45 = vmul.f32 %v43, %v43
    %v46 = vsub.f32 %v44, %v45
    %v47 = vadd.f32 %v46, 1e-05
    %v48 = vrsqrt.pop %v47
    %v49 = vsub.f32 %v34, %v43
    %v50 = vld [vmem:[%s1] sm:$0x1]
    %v52 = vlaneseq
    %v53 = vshrl.u32 %v52, 7
    %v54 = vsub.s32 0, %v53
    %v55 = vrot.slane %v50, %v54
    %v57 = vmul.f32 %v48, %v55
    %v58 = vmul.f32 %v49, %v57
    %v59 = vld [vmem:[%s2] sm:$0x1]
    %v61 = vlaneseq
    %v62 = vshrl.u32 %v61, 7
    %v63 = vsub.s32 0, %v62
    %v64 = vrot.slane %v59, %v63
    %v66 = vadd.f32 %v58, %v64
    %v67 = vmax.f32 %v66, 0.0
    %v68 = vpack.c.bf16 %v67, %v67
    %v69 = vld [vmem:[%s3] sm:$0xff]
    %v70 = vld [vmem:[%s3 + $0x8] sm:$0xff]
    %v71 = vld [vmem:[%s3 + $0x10] sm:$0xff]
    %v72 = vld [vmem:[%s3 + $0x18] sm:$0xff]
    %v73 = vld [vmem:[%s3 + $0x20] sm:$0xff]
    %v74 = vld [vmem:[%s3 + $0x28] sm:$0xff]
    %v75 = vld [vmem:[%s3 + $0x30] sm:$0xff]
    %v76 = vld [vmem:[%s3 + $0x38] sm:$0xff]
    %v77 = vld [vmem:[%s4] sm:$0xf]
    %v79 = vlaneseq
    %v80 = vshrl.u32 %v79, 7
    %v81 = vsub.s32 0, %v80
    %v82 = vrot.slane %v77, %v81
    %v83 = vlaneseq
    %v84 = vshrl.u32 %v83, 7
    %v85 = vsub.s32 1, %v84
    %v86 = vrot.slane %v77, %v85
    %v87 = vlaneseq
    %v88 = vshrl.u32 %v87, 7
    %v89 = vsub.s32 2, %v88
    %v90 = vrot.slane %v77, %v89
    %v91 = vlaneseq
    %v92 = vshrl.u32 %v91, 7
    %v93 = vsub.s32 3, %v92
    %v94 = vrot.slane %v77, %v93
    %v107 = vunpack.c.l.b16 %v69
    %v108 = vunpack.c.h.b16 %v69
    %v109 = vunpack.c.l.b16 %v70
    %v110 = vunpack.c.h.b16 %v70
    %v111 = vunpack.c.l.b16 %v71
    %v112 = vunpack.c.h.b16 %v71
    %v113 = vunpack.c.l.b16 %v72
    %v114 = vunpack.c.h.b16 %v72
    %v115 = vunpack.c.l.b16 %v73
    %v116 = vunpack.c.h.b16 %v73
    %v117 = vunpack.c.l.b16 %v74
    %v118 = vunpack.c.h.b16 %v74
    %v119 = vunpack.c.l.b16 %v75
    %v120 = vunpack.c.h.b16 %v75
    %v121 = vunpack.c.l.b16 %v76
    %v122 = vunpack.c.h.b16 %v76
    %v123 = vpack.c.b16 %v111, %v107
    %v124 = vpack.c.b16 %v112, %v108
    %v125 = vpack.c.b16 %v113, %v109
    %v126 = vpack.c.b16 %v114, %v110
    %v127 = vpack.c.b16 %v119, %v115
    %v128 = vpack.c.b16 %v120, %v116
    %v129 = vpack.c.b16 %v121, %v117
    %v130 = vpack.c.b16 %v122, %v118
    %v140 = vsel %vm35, %v68, 0
    %142 = vmatprep.subr.bf16.mxu0 %v124
    %143 = vmatpush1.bf16.msra.mxu0 %v123
    %144 = vmatprep.subr.bf16.mxu0 %v128
    %145 = vmatpush1.bf16.msra.mxu0 %v127
    %146 = vmatprep.subr.bf16.mxu0 0
    %147 = vmatpush1.bf16.msra.mxu0 0
    %148 = vmatprep.subr.bf16.mxu0 0
    %149 = vmatpush1.bf16.msra.mxu0 0
    %150 = vmatprep.subr.bf16.mxu0 0
    %151 = vmatpush1.bf16.msra.mxu0 0
    %152 = vmatprep.subr.bf16.mxu0 0
    %153 = vmatpush1.bf16.msra.mxu0 0
    %154 = vmatprep.subr.bf16.mxu0 0
    %155 = vmatpush1.bf16.msra.mxu0 0
    %156 = vmatprep.subr.bf16.mxu0 0
    %157 = vmatpush1.bf16.msra.mxu0 0
    %158 = vmatprep.subr.bf16.mxu0 0
    %159 = vmatpush1.bf16.msra.mxu0 0
    %160 = vmatprep.subr.bf16.mxu0 0
    %161 = vmatpush1.bf16.msra.mxu0 0
    %162 = vmatprep.subr.bf16.mxu0 0
    %163 = vmatpush1.bf16.msra.mxu0 0
    %164 = vmatprep.subr.bf16.mxu0 0
    %165 = vmatpush1.bf16.msra.mxu0 0
    %166 = vmatprep.subr.bf16.mxu0 0
    %167 = vmatpush1.bf16.msra.mxu0 0
    %168 = vmatprep.subr.bf16.mxu0 0
    %169 = vmatpush1.bf16.msra.mxu0 0
    %170 = vmatprep.subr.bf16.mxu0 0
    %171 = vmatpush1.bf16.msra.mxu0 0
    %172 = vmatprep.subr.bf16.mxu0 0
    %173 = vmatpush1.bf16.msra.mxu0 0
    %174 = vmatprep.mubr.bf16.mxu0 0
    %175 = vmatmul.mubr.bf16.gmra.mrb[0].mxu0 %v140
    %v176 = vpop.f32.mrb[0].mxu0
    %v177 = vadd.f32 %v82, %v176
    %v178 = vpop.f32.mrb[0].mxu0
    %v179 = vadd.f32 %v86, %v178
    %v180 = vpop.f32.mrb[0].mxu0
    %v181 = vpop.f32.mrb[0].mxu0
    %182 = vdwg.mxu0
    %183 = vmatprep.subr.bf16.mxu0 %v126
    %184 = vmatpush1.bf16.msra.mxu0 %v125
    %185 = vmatprep.subr.bf16.mxu0 %v130
    %186 = vmatpush1.bf16.msra.mxu0 %v129
    %187 = vmatprep.subr.bf16.mxu0 0
    %188 = vmatpush1.bf16.msra.mxu0 0
    %189 = vmatprep.subr.bf16.mxu0 0
    %190 = vmatpush1.bf16.msra.mxu0 0
    %191 = vmatprep.subr.bf16.mxu0 0
    %192 = vmatpush1.bf16.msra.mxu0 0
    %193 = vmatprep.subr.bf16.mxu0 0
    %194 = vmatpush1.bf16.msra.mxu0 0
    %195 = vmatprep.subr.bf16.mxu0 0
    %196 = vmatpush1.bf16.msra.mxu0 0
    %197 = vmatprep.subr.bf16.mxu0 0
    %198 = vmatpush1.bf16.msra.mxu0 0
    %199 = vmatprep.subr.bf16.mxu0 0
    %200 = vmatpush1.bf16.msra.mxu0 0
    %201 = vmatprep.subr.bf16.mxu0 0
    %202 = vmatpush1.bf16.msra.mxu0 0
    %203 = vmatprep.subr.bf16.mxu0 0
    %204 = vmatpush1.bf16.msra.mxu0 0
    %205 = vmatprep.subr.bf16.mxu0 0
    %206 = vmatpush1.bf16.msra.mxu0 0
    %207 = vmatprep.subr.bf16.mxu0 0
    %208 = vmatpush1.bf16.msra.mxu0 0
    %209 = vmatprep.subr.bf16.mxu0 0
    %210 = vmatpush1.bf16.msra.mxu0 0
    %211 = vmatprep.subr.bf16.mxu0 0
    %212 = vmatpush1.bf16.msra.mxu0 0
    %213 = vmatprep.subr.bf16.mxu0 0
    %214 = vmatpush1.bf16.msra.mxu0 0
    %215 = vmatprep.mubr.bf16.mxu0 0
    %216 = vmatmul.mubr.bf16.gmra.mrb[0].mxu0 %v140
    %v217 = vpop.f32.mrb[0].mxu0
    %v218 = vadd.f32 %v90, %v217
    %v219 = vpop.f32.mrb[0].mxu0
    %v220 = vadd.f32 %v94, %v219
    %v221 = vpop.f32.mrb[0].mxu0
    %v222 = vpop.f32.mrb[0].mxu0
    %223 = vdwg.mxu0
    %v224 = vmax.f32 %v177, 0.0
    %v225 = vmax.f32 %v179, 0.0
    %v226 = vmax.f32 %v218, 0.0
    %v227 = vmax.f32 %v220, 0.0
    %v228 = vpack.c.bf16 %v224, %v224
    %v229 = vpack.c.bf16 %v225, %v225
    %v230 = vpack.c.bf16 %v226, %v226
    %v231 = vpack.c.bf16 %v227, %v227
    %v232 = vld [vmem:[%s5] sm:$0xff]
    %v233 = vld [vmem:[%s5 + $0x8] sm:$0xf]
    %v234 = vld [vmem:[%s5 + $0xc] sm:$0xff]
    %v235 = vld [vmem:[%s5 + $0x14] sm:$0xf]
    %v236 = vld [vmem:[%s5 + $0x18] sm:$0xff]
    %v237 = vld [vmem:[%s5 + $0x20] sm:$0xf]
    %v238 = vld [vmem:[%s5 + $0x24] sm:$0xff]
    %v239 = vld [vmem:[%s5 + $0x2c] sm:$0xf]
    %v240 = vld [vmem:[%s5 + $0x30] sm:$0xff]
    %v241 = vld [vmem:[%s5 + $0x38] sm:$0xf]
    %v242 = vld [vmem:[%s5 + $0x3c] sm:$0xff]
    %v243 = vld [vmem:[%s5 + $0x44] sm:$0xf]
    %v244 = vld [vmem:[%s5 + $0x48] sm:$0xff]
    %v245 = vld [vmem:[%s5 + $0x50] sm:$0xf]
    %v246 = vld [vmem:[%s5 + $0x54] sm:$0xff]
    %v247 = vld [vmem:[%s5 + $0x5c] sm:$0xf]
    %v248 = vld [vmem:[%s5 + $0x60] sm:$0xff]
    %v249 = vld [vmem:[%s5 + $0x68] sm:$0xf]
    %v250 = vld [vmem:[%s5 + $0x6c] sm:$0xff]
    %v251 = vld [vmem:[%s5 + $0x74] sm:$0xf]
    %v252 = vld [vmem:[%s5 + $0x78] sm:$0xff]
    %v253 = vld [vmem:[%s5 + $0x80] sm:$0xf]
    %v254 = vld [vmem:[%s5 + $0x84] sm:$0xff]
    %v255 = vld [vmem:[%s5 + $0x8c] sm:$0xf]
    %v256 = vld [vmem:[%s5 + $0x90] sm:$0xff]
    %v257 = vld [vmem:[%s5 + $0x98] sm:$0xf]
    %v258 = vld [vmem:[%s5 + $0x9c] sm:$0xff]
    %v259 = vld [vmem:[%s5 + $0xa4] sm:$0xf]
    %v260 = vld [vmem:[%s5 + $0xa8] sm:$0xff]
    %v261 = vld [vmem:[%s5 + $0xb0] sm:$0xf]
    %v262 = vld [vmem:[%s5 + $0xb4] sm:$0xff]
    %v263 = vld [vmem:[%s5 + $0xbc] sm:$0xf]
    %v264 = vld [vmem:[%s5 + $0xc0] sm:$0xff]
    %v265 = vld [vmem:[%s5 + $0xc8] sm:$0xf]
    %v266 = vld [vmem:[%s5 + $0xcc] sm:$0xff]
    %v267 = vld [vmem:[%s5 + $0xd4] sm:$0xf]
    %v268 = vld [vmem:[%s5 + $0xd8] sm:$0xff]
    %v269 = vld [vmem:[%s5 + $0xe0] sm:$0xf]
    %v270 = vld [vmem:[%s5 + $0xe4] sm:$0xff]
    %v271 = vld [vmem:[%s5 + $0xec] sm:$0xf]
    %v272 = vld [vmem:[%s5 + $0xf0] sm:$0xff]
    %v273 = vld [vmem:[%s5 + $0xf8] sm:$0xf]
    %v274 = vld [vmem:[%s5 + $0xfc] sm:$0xff]
    %v275 = vld [vmem:[%s5 + $0x104] sm:$0xf]
    %v276 = vld [vmem:[%s5 + $0x108] sm:$0xff]
    %v277 = vld [vmem:[%s5 + $0x110] sm:$0xf]
    %v278 = vld [vmem:[%s5 + $0x114] sm:$0xff]
    %v279 = vld [vmem:[%s5 + $0x11c] sm:$0xf]
    %v280 = vld [vmem:[%s5 + $0x120] sm:$0xff]
    %v281 = vld [vmem:[%s5 + $0x128] sm:$0xf]
    %v282 = vld [vmem:[%s5 + $0x12c] sm:$0xff]
    %v283 = vld [vmem:[%s5 + $0x134] sm:$0xf]
    %v284 = vld [vmem:[%s5 + $0x138] sm:$0xff]
    %v285 = vld [vmem:[%s5 + $0x140] sm:$0xf]
    %v286 = vld [vmem:[%s5 + $0x144] sm:$0xff]
    %v287 = vld [vmem:[%s5 + $0x14c] sm:$0xf]
    %v288 = vld [vmem:[%s5 + $0x150] sm:$0xff]
    %v289 = vld [vmem:[%s5 + $0x158] sm:$0xf]
    %v290 = vld [vmem:[%s5 + $0x15c] sm:$0xff]
    %v291 = vld [vmem:[%s5 + $0x164] sm:$0xf]
    %v292 = vld [vmem:[%s5 + $0x168] sm:$0xff]
    %v293 = vld [vmem:[%s5 + $0x170] sm:$0xf]
    %v294 = vld [vmem:[%s5 + $0x174] sm:$0xff]
    %v295 = vld [vmem:[%s5 + $0x17c] sm:$0xf]
    %v296 = vld [vmem:[%s5 + $0x180] sm:$0xff]
    %v297 = vld [vmem:[%s5 + $0x188] sm:$0xf]
    %v298 = vld [vmem:[%s5 + $0x18c] sm:$0xff]
    %v299 = vld [vmem:[%s5 + $0x194] sm:$0xf]
    %v300 = vld [vmem:[%s5 + $0x198] sm:$0xff]
    %v301 = vld [vmem:[%s5 + $0x1a0] sm:$0xf]
    %v302 = vld [vmem:[%s5 + $0x1a4] sm:$0xff]
    %v303 = vld [vmem:[%s5 + $0x1ac] sm:$0xf]
    %v304 = vld [vmem:[%s5 + $0x1b0] sm:$0xff]
    %v305 = vld [vmem:[%s5 + $0x1b8] sm:$0xf]
    %v306 = vld [vmem:[%s5 + $0x1bc] sm:$0xff]
    %v307 = vld [vmem:[%s5 + $0x1c4] sm:$0xf]
    %v308 = vld [vmem:[%s5 + $0x1c8] sm:$0xff]
    %v309 = vld [vmem:[%s5 + $0x1d0] sm:$0xf]
    %v310 = vld [vmem:[%s5 + $0x1d4] sm:$0xff]
    %v311 = vld [vmem:[%s5 + $0x1dc] sm:$0xf]
    %v312 = vld [vmem:[%s5 + $0x1e0] sm:$0xff]
    %v313 = vld [vmem:[%s5 + $0x1e8] sm:$0xf]
    %v314 = vld [vmem:[%s5 + $0x1ec] sm:$0xff]
    %v315 = vld [vmem:[%s5 + $0x1f4] sm:$0xf]
    %v316 = vld [vmem:[%s5 + $0x1f8] sm:$0xff]
    %v317 = vld [vmem:[%s5 + $0x200] sm:$0xf]
    %v318 = vld [vmem:[%s5 + $0x204] sm:$0xff]
    %v319 = vld [vmem:[%s5 + $0x20c] sm:$0xf]
    %v320 = vld [vmem:[%s5 + $0x210] sm:$0xff]
    %v321 = vld [vmem:[%s5 + $0x218] sm:$0xf]
    %v322 = vld [vmem:[%s5 + $0x21c] sm:$0xff]
    %v323 = vld [vmem:[%s5 + $0x224] sm:$0xf]
    %v324 = vld [vmem:[%s5 + $0x228] sm:$0xff]
    %v325 = vld [vmem:[%s5 + $0x230] sm:$0xf]
    %v326 = vld [vmem:[%s5 + $0x234] sm:$0xff]
    %v327 = vld [vmem:[%s5 + $0x23c] sm:$0xf]
    %v328 = vld [vmem:[%s5 + $0x240] sm:$0xff]
    %v329 = vld [vmem:[%s5 + $0x248] sm:$0xf]
    %v330 = vld [vmem:[%s5 + $0x24c] sm:$0xff]
    %v331 = vld [vmem:[%s5 + $0x254] sm:$0xf]
    %v332 = vld [vmem:[%s5 + $0x258] sm:$0xff]
    %v333 = vld [vmem:[%s5 + $0x260] sm:$0xf]
    %v334 = vld [vmem:[%s5 + $0x264] sm:$0xff]
    %v335 = vld [vmem:[%s5 + $0x26c] sm:$0xf]
    %v336 = vld [vmem:[%s5 + $0x270] sm:$0xff]
    %v337 = vld [vmem:[%s5 + $0x278] sm:$0xf]
    %v338 = vld [vmem:[%s5 + $0x27c] sm:$0xff]
    %v339 = vld [vmem:[%s5 + $0x284] sm:$0xf]
    %v340 = vld [vmem:[%s5 + $0x288] sm:$0xff]
    %v341 = vld [vmem:[%s5 + $0x290] sm:$0xf]
    %v342 = vld [vmem:[%s5 + $0x294] sm:$0xff]
    %v343 = vld [vmem:[%s5 + $0x29c] sm:$0xf]
    %v344 = vld [vmem:[%s5 + $0x2a0] sm:$0xff]
    %v345 = vld [vmem:[%s5 + $0x2a8] sm:$0xf]
    %v346 = vld [vmem:[%s5 + $0x2ac] sm:$0xff]
    %v347 = vld [vmem:[%s5 + $0x2b4] sm:$0xf]
    %v348 = vld [vmem:[%s5 + $0x2b8] sm:$0xff]
    %v349 = vld [vmem:[%s5 + $0x2c0] sm:$0xf]
    %v350 = vld [vmem:[%s5 + $0x2c4] sm:$0xff]
    %v351 = vld [vmem:[%s5 + $0x2cc] sm:$0xf]
    %v352 = vld [vmem:[%s5 + $0x2d0] sm:$0xff]
    %v353 = vld [vmem:[%s5 + $0x2d8] sm:$0xf]
    %v354 = vld [vmem:[%s5 + $0x2dc] sm:$0xff]
    %v355 = vld [vmem:[%s5 + $0x2e4] sm:$0xf]
    %v356 = vld [vmem:[%s5 + $0x2e8] sm:$0xff]
    %v357 = vld [vmem:[%s5 + $0x2f0] sm:$0xf]
    %v358 = vld [vmem:[%s5 + $0x2f4] sm:$0xff]
    %v359 = vld [vmem:[%s5 + $0x2fc] sm:$0xf]
    %v360 = vld [vmem:[%s6] sm:$0x7]
    %v362 = vlaneseq
    %v363 = vshrl.u32 %v362, 7
    %v364 = vsub.s32 0, %v363
    %v365 = vrot.slane %v360, %v364
    %v366 = vlaneseq
    %v367 = vshrl.u32 %v366, 7
    %v368 = vsub.s32 1, %v367
    %v369 = vrot.slane %v360, %v368
    %v370 = vlaneseq
    %v371 = vshrl.u32 %v370, 7
    %v372 = vsub.s32 2, %v371
    %v373 = vrot.slane %v360, %v372
    %v505 = vunpack.c.l.b16 %v232
    %v506 = vunpack.c.h.b16 %v232
    %v507 = vunpack.c.l.b16 %v233
    %v508 = vunpack.c.l.b16 %v234
    %v509 = vunpack.c.h.b16 %v234
    %v510 = vunpack.c.l.b16 %v235
    %v511 = vunpack.c.l.b16 %v236
    %v512 = vunpack.c.h.b16 %v236
    %v513 = vunpack.c.l.b16 %v237
    %v514 = vunpack.c.l.b16 %v238
    %v515 = vunpack.c.h.b16 %v238
    %v516 = vunpack.c.l.b16 %v239
    %v517 = vunpack.c.l.b16 %v240
    %v518 = vunpack.c.h.b16 %v240
    %v519 = vunpack.c.l.b16 %v241
    %v520 = vunpack.c.l.b16 %v242
    %v521 = vunpack.c.h.b16 %v242
    %v522 = vunpack.c.l.b16 %v243
    %v523 = vunpack.c.l.b16 %v244
    %v524 = vunpack.c.h.b16 %v244
    %v525 = vunpack.c.l.b16 %v245
    %v526 = vunpack.c.l.b16 %v246
    %v527 = vunpack.c.h.b16 %v246
    %v528 = vunpack.c.l.b16 %v247
    %v529 = vunpack.c.l.b16 %v248
    %v530 = vunpack.c.h.b16 %v248
    %v531 = vunpack.c.l.b16 %v249
    %v532 = vunpack.c.l.b16 %v250
    %v533 = vunpack.c.h.b16 %v250
    %v534 = vunpack.c.l.b16 %v251
    %v535 = vunpack.c.l.b16 %v252
    %v536 = vunpack.c.h.b16 %v252
    %v537 = vunpack.c.l.b16 %v253
    %v538 = vunpack.c.l.b16 %v254
    %v539 = vunpack.c.h.b16 %v254
    %v540 = vunpack.c.l.b16 %v255
    %v541 = vunpack.c.l.b16 %v256
    %v542 = vunpack.c.h.b16 %v256
    %v543 = vunpack.c.l.b16 %v257
    %v544 = vunpack.c.l.b16 %v258
    %v545 = vunpack.c.h.b16 %v258
    %v546 = vunpack.c.l.b16 %v259
    %v547 = vunpack.c.l.b16 %v260
    %v548 = vunpack.c.h.b16 %v260
    %v549 = vunpack.c.l.b16 %v261
    %v550 = vunpack.c.l.b16 %v262
    %v551 = vunpack.c.h.b16 %v262
    %v552 = vunpack.c.l.b16 %v263
    %v553 = vunpack.c.l.b16 %v264
    %v554 = vunpack.c.h.b16 %v264
    %v555 = vunpack.c.l.b16 %v265
    %v556 = vunpack.c.l.b16 %v266
    %v557 = vunpack.c.h.b16 %v266
    %v558 = vunpack.c.l.b16 %v267
    %v559 = vunpack.c.l.b16 %v268
    %v560 = vunpack.c.h.b16 %v268
    %v561 = vunpack.c.l.b16 %v269
    %v562 = vunpack.c.l.b16 %v270
    %v563 = vunpack.c.h.b16 %v270
    %v564 = vunpack.c.l.b16 %v271
    %v565 = vunpack.c.l.b16 %v272
    %v566 = vunpack.c.h.b16 %v272
    %v567 = vunpack.c.l.b16 %v273
    %v568 = vunpack.c.l.b16 %v274
    %v569 = vunpack.c.h.b16 %v274
    %v570 = vunpack.c.l.b16 %v275
    %v571 = vunpack.c.l.b16 %v276
    %v572 = vunpack.c.h.b16 %v276
    %v573 = vunpack.c.l.b16 %v277
    %v574 = vunpack.c.l.b16 %v278
    %v575 = vunpack.c.h.b16 %v278
    %v576 = vunpack.c.l.b16 %v279
    %v577 = vunpack.c.l.b16 %v280
    %v578 = vunpack.c.h.b16 %v280
    %v579 = vunpack.c.l.b16 %v281
    %v580 = vunpack.c.l.b16 %v282
    %v581 = vunpack.c.h.b16 %v282
    %v582 = vunpack.c.l.b16 %v283
    %v583 = vunpack.c.l.b16 %v284
    %v584 = vunpack.c.h.b16 %v284
    %v585 = vunpack.c.l.b16 %v285
    %v586 = vunpack.c.l.b16 %v286
    %v587 = vunpack.c.h.b16 %v286
    %v588 = vunpack.c.l.b16 %v287
    %v589 = vunpack.c.l.b16 %v288
    %v590 = vunpack.c.h.b16 %v288
    %v591 = vunpack.c.l.b16 %v289
    %v592 = vunpack.c.l.b16 %v290
    %v593 = vunpack.c.h.b16 %v290
    %v594 = vunpack.c.l.b16 %v291
    %v595 = vunpack.c.l.b16 %v292
    %v596 = vunpack.c.h.b16 %v292
    %v597 = vunpack.c.l.b16 %v293
    %v598 = vunpack.c.l.b16 %v294
    %v599 = vunpack.c.h.b16 %v294
    %v600 = vunpack.c.l.b16 %v295
    %v601 = vunpack.c.l.b16 %v296
    %v602 = vunpack.c.h.b16 %v296
    %v603 = vunpack.c.l.b16 %v297
    %v604 = vunpack.c.l.b16 %v298
    %v605 = vunpack.c.h.b16 %v298
    %v606 = vunpack.c.l.b16 %v299
    %v607 = vunpack.c.l.b16 %v300
    %v608 = vunpack.c.h.b16 %v300
    %v609 = vunpack.c.l.b16 %v301
    %v610 = vunpack.c.l.b16 %v302
    %v611 = vunpack.c.h.b16 %v302
    %v612 = vunpack.c.l.b16 %v303
    %v613 = vunpack.c.l.b16 %v304
    %v614 = vunpack.c.h.b16 %v304
    %v615 = vunpack.c.l.b16 %v305
    %v616 = vunpack.c.l.b16 %v306
    %v617 = vunpack.c.h.b16 %v306
    %v618 = vunpack.c.l.b16 %v307
    %v619 = vunpack.c.l.b16 %v308
    %v620 = vunpack.c.h.b16 %v308
    %v621 = vunpack.c.l.b16 %v309
    %v622 = vunpack.c.l.b16 %v310
    %v623 = vunpack.c.h.b16 %v310
    %v624 = vunpack.c.l.b16 %v311
    %v625 = vunpack.c.l.b16 %v312
    %v626 = vunpack.c.h.b16 %v312
    %v627 = vunpack.c.l.b16 %v313
    %v628 = vunpack.c.l.b16 %v314
    %v629 = vunpack.c.h.b16 %v314
    %v630 = vunpack.c.l.b16 %v315
    %v631 = vunpack.c.l.b16 %v316
    %v632 = vunpack.c.h.b16 %v316
    %v633 = vunpack.c.l.b16 %v317
    %v634 = vunpack.c.l.b16 %v318
    %v635 = vunpack.c.h.b16 %v318
    %v636 = vunpack.c.l.b16 %v319
    %v637 = vunpack.c.l.b16 %v320
    %v638 = vunpack.c.h.b16 %v320
    %v639 = vunpack.c.l.b16 %v321
    %v640 = vunpack.c.l.b16 %v322
    %v641 = vunpack.c.h.b16 %v322
    %v642 = vunpack.c.l.b16 %v323
    %v643 = vunpack.c.l.b16 %v324
    %v644 = vunpack.c.h.b16 %v324
    %v645 = vunpack.c.l.b16 %v325
    %v646 = vunpack.c.l.b16 %v326
    %v647 = vunpack.c.h.b16 %v326
    %v648 = vunpack.c.l.b16 %v327
    %v649 = vunpack.c.l.b16 %v328
    %v650 = vunpack.c.h.b16 %v328
    %v651 = vunpack.c.l.b16 %v329
    %v652 = vunpack.c.l.b16 %v330
    %v653 = vunpack.c.h.b16 %v330
    %v654 = vunpack.c.l.b16 %v331
    %v655 = vunpack.c.l.b16 %v332
    %v656 = vunpack.c.h.b16 %v332
    %v657 = vunpack.c.l.b16 %v333
    %v658 = vunpack.c.l.b16 %v334
    %v659 = vunpack.c.h.b16 %v334
    %v660 = vunpack.c.l.b16 %v335
    %v661 = vunpack.c.l.b16 %v336
    %v662 = vunpack.c.h.b16 %v336
    %v663 = vunpack.c.l.b16 %v337
    %v664 = vunpack.c.l.b16 %v338
    %v665 = vunpack.c.h.b16 %v338
    %v666 = vunpack.c.l.b16 %v339
    %v667 = vunpack.c.l.b16 %v340
    %v668 = vunpack.c.h.b16 %v340
    %v669 = vunpack.c.l.b16 %v341
    %v670 = vunpack.c.l.b16 %v342
    %v671 = vunpack.c.h.b16 %v342
    %v672 = vunpack.c.l.b16 %v343
    %v673 = vunpack.c.l.b16 %v344
    %v674 = vunpack.c.h.b16 %v344
    %v675 = vunpack.c.l.b16 %v345
    %v676 = vunpack.c.l.b16 %v346
    %v677 = vunpack.c.h.b16 %v346
    %v678 = vunpack.c.l.b16 %v347
    %v679 = vunpack.c.l.b16 %v348
    %v680 = vunpack.c.h.b16 %v348
    %v681 = vunpack.c.l.b16 %v349
    %v682 = vunpack.c.l.b16 %v350
    %v683 = vunpack.c.h.b16 %v350
    %v684 = vunpack.c.l.b16 %v351
    %v685 = vunpack.c.l.b16 %v352
    %v686 = vunpack.c.h.b16 %v352
    %v687 = vunpack.c.l.b16 %v353
    %v688 = vunpack.c.l.b16 %v354
    %v689 = vunpack.c.h.b16 %v354
    %v690 = vunpack.c.l.b16 %v355
    %v691 = vunpack.c.l.b16 %v356
    %v692 = vunpack.c.h.b16 %v356
    %v693 = vunpack.c.l.b16 %v357
    %v694 = vunpack.c.l.b16 %v358
    %v695 = vunpack.c.h.b16 %v358
    %v696 = vunpack.c.l.b16 %v359
    %v697 = vpack.c.b16 %v508, %v505
    %v698 = vpack.c.b16 %v509, %v506
    %v699 = vpack.c.b16 %v510, %v507
    %v700 = vpack.c.b16 %v514, %v511
    %v701 = vpack.c.b16 %v515, %v512
    %v702 = vpack.c.b16 %v516, %v513
    %v703 = vpack.c.b16 %v520, %v517
    %v704 = vpack.c.b16 %v521, %v518
    %v705 = vpack.c.b16 %v522, %v519
    %v706 = vpack.c.b16 %v526, %v523
    %v707 = vpack.c.b16 %v527, %v524
    %v708 = vpack.c.b16 %v528, %v525
    %v709 = vpack.c.b16 %v532, %v529
    %v710 = vpack.c.b16 %v533, %v530
    %v711 = vpack.c.b16 %v534, %v531
    %v712 = vpack.c.b16 %v538, %v535
    %v713 = vpack.c.b16 %v539, %v536
    %v714 = vpack.c.b16 %v540, %v537
    %v715 = vpack.c.b16 %v544, %v541
    %v716 = vpack.c.b16 %v545, %v542
    %v717 = vpack.c.b16 %v546, %v543
    %v718 = vpack.c.b16 %v550, %v547
    %v719 = vpack.c.b16 %v551, %v548
    %v720 = vpack.c.b16 %v552, %v549
    %v721 = vpack.c.b16 %v556, %v553
    %v722 = vpack.c.b16 %v557, %v554
    %v723 = vpack.c.b16 %v558, %v555
    %v724 = vpack.c.b16 %v562, %v559
    %v725 = vpack.c.b16 %v563, %v560
    %v726 = vpack.c.b16 %v564, %v561
    %v727 = vpack.c.b16 %v568, %v565
    %v728 = vpack.c.b16 %v569, %v566
    %v729 = vpack.c.b16 %v570, %v567
    %v730 = vpack.c.b16 %v574, %v571
    %v731 = vpack.c.b16 %v575, %v572
    %v732 = vpack.c.b16 %v576, %v573
    %v733 = vpack.c.b16 %v580, %v577
    %v734 = vpack.c.b16 %v581, %v578
    %v735 = vpack.c.b16 %v582, %v579
    %v736 = vpack.c.b16 %v586, %v583
    %v737 = vpack.c.b16 %v587, %v584
    %v738 = vpack.c.b16 %v588, %v585
    %v739 = vpack.c.b16 %v592, %v589
    %v740 = vpack.c.b16 %v593, %v590
    %v741 = vpack.c.b16 %v594, %v591
    %v742 = vpack.c.b16 %v598, %v595
    %v743 = vpack.c.b16 %v599, %v596
    %v744 = vpack.c.b16 %v600, %v597
    %v745 = vpack.c.b16 %v604, %v601
    %v746 = vpack.c.b16 %v605, %v602
    %v747 = vpack.c.b16 %v606, %v603
    %v748 = vpack.c.b16 %v610, %v607
    %v749 = vpack.c.b16 %v611, %v608
    %v750 = vpack.c.b16 %v612, %v609
    %v751 = vpack.c.b16 %v616, %v613
    %v752 = vpack.c.b16 %v617, %v614
    %v753 = vpack.c.b16 %v618, %v615
    %v754 = vpack.c.b16 %v622, %v619
    %v755 = vpack.c.b16 %v623, %v620
    %v756 = vpack.c.b16 %v624, %v621
    %v757 = vpack.c.b16 %v628, %v625
    %v758 = vpack.c.b16 %v629, %v626
    %v759 = vpack.c.b16 %v630, %v627
    %v760 = vpack.c.b16 %v634, %v631
    %v761 = vpack.c.b16 %v635, %v632
    %v762 = vpack.c.b16 %v636, %v633
    %v763 = vpack.c.b16 %v640, %v637
    %v764 = vpack.c.b16 %v641, %v638
    %v765 = vpack.c.b16 %v642, %v639
    %v766 = vpack.c.b16 %v646, %v643
    %v767 = vpack.c.b16 %v647, %v644
    %v768 = vpack.c.b16 %v648, %v645
    %v769 = vpack.c.b16 %v652, %v649
    %v770 = vpack.c.b16 %v653, %v650
    %v771 = vpack.c.b16 %v654, %v651
    %v772 = vpack.c.b16 %v658, %v655
    %v773 = vpack.c.b16 %v659, %v656
    %v774 = vpack.c.b16 %v660, %v657
    %v775 = vpack.c.b16 %v664, %v661
    %v776 = vpack.c.b16 %v665, %v662
    %v777 = vpack.c.b16 %v666, %v663
    %v778 = vpack.c.b16 %v670, %v667
    %v779 = vpack.c.b16 %v671, %v668
    %v780 = vpack.c.b16 %v672, %v669
    %v781 = vpack.c.b16 %v676, %v673
    %v782 = vpack.c.b16 %v677, %v674
    %v783 = vpack.c.b16 %v678, %v675
    %v784 = vpack.c.b16 %v682, %v679
    %v785 = vpack.c.b16 %v683, %v680
    %v786 = vpack.c.b16 %v684, %v681
    %v787 = vpack.c.b16 %v688, %v685
    %v788 = vpack.c.b16 %v689, %v686
    %v789 = vpack.c.b16 %v690, %v687
    %v790 = vpack.c.b16 %v694, %v691
    %v791 = vpack.c.b16 %v695, %v692
    %v792 = vpack.c.b16 %v696, %v693
    %889 = vmatprep.subr.bf16.mxu0 %v698
    %890 = vmatpush1.bf16.msra.mxu0 %v697
    %891 = vmatprep.subr.bf16.mxu0 %v701
    %892 = vmatpush1.bf16.msra.mxu0 %v700
    %893 = vmatprep.subr.bf16.mxu0 %v704
    %894 = vmatpush1.bf16.msra.mxu0 %v703
    %895 = vmatprep.subr.bf16.mxu0 %v707
    %896 = vmatpush1.bf16.msra.mxu0 %v706
    %897 = vmatprep.subr.bf16.mxu0 %v710
    %898 = vmatpush1.bf16.msra.mxu0 %v709
    %899 = vmatprep.subr.bf16.mxu0 %v713
    %900 = vmatpush1.bf16.msra.mxu0 %v712
    %901 = vmatprep.subr.bf16.mxu0 %v716
    %902 = vmatpush1.bf16.msra.mxu0 %v715
    %903 = vmatprep.subr.bf16.mxu0 %v719
    %904 = vmatpush1.bf16.msra.mxu0 %v718
    %905 = vmatprep.subr.bf16.mxu0 %v722
    %906 = vmatpush1.bf16.msra.mxu0 %v721
    %907 = vmatprep.subr.bf16.mxu0 %v725
    %908 = vmatpush1.bf16.msra.mxu0 %v724
    %909 = vmatprep.subr.bf16.mxu0 %v728
    %910 = vmatpush1.bf16.msra.mxu0 %v727
    %911 = vmatprep.subr.bf16.mxu0 %v731
    %912 = vmatpush1.bf16.msra.mxu0 %v730
    %913 = vmatprep.subr.bf16.mxu0 %v734
    %914 = vmatpush1.bf16.msra.mxu0 %v733
    %915 = vmatprep.subr.bf16.mxu0 %v737
    %916 = vmatpush1.bf16.msra.mxu0 %v736
    %917 = vmatprep.subr.bf16.mxu0 %v740
    %918 = vmatpush1.bf16.msra.mxu0 %v739
    %919 = vmatprep.subr.bf16.mxu0 %v743
    %920 = vmatpush1.bf16.msra.mxu0 %v742
    %921 = vmatprep.mubr.bf16.mxu0 %v229
    %922 = vmatmul.mubr.bf16.gmra.mrb[0].mxu0 %v228
    %v923 = vpop.f32.mrb[0].mxu0
    %v924 = vadd.f32 %v365, %v923
    %v925 = vpop.f32.mrb[0].mxu0
    %v926 = vadd.f32 %v369, %v925
    %v927 = vpop.f32.mrb[0].mxu0
    %v928 = vpop.f32.mrb[0].mxu0
    %929 = vdwg.mxu0
    %930 = vmatprep.subr.bf16.mxu0 %v746
    %931 = vmatpush1.bf16.msra.mxu0 %v745
    %932 = vmatprep.subr.bf16.mxu0 %v749
    %933 = vmatpush1.bf16.msra.mxu0 %v748
    %934 = vmatprep.subr.bf16.mxu0 %v752
    %935 = vmatpush1.bf16.msra.mxu0 %v751
    %936 = vmatprep.subr.bf16.mxu0 %v755
    %937 = vmatpush1.bf16.msra.mxu0 %v754
    %938 = vmatprep.subr.bf16.mxu0 %v758
    %939 = vmatpush1.bf16.msra.mxu0 %v757
    %940 = vmatprep.subr.bf16.mxu0 %v761
    %941 = vmatpush1.bf16.msra.mxu0 %v760
    %942 = vmatprep.subr.bf16.mxu0 %v764
    %943 = vmatpush1.bf16.msra.mxu0 %v763
    %944 = vmatprep.subr.bf16.mxu0 %v767
    %945 = vmatpush1.bf16.msra.mxu0 %v766
    %946 = vmatprep.subr.bf16.mxu0 %v770
    %947 = vmatpush1.bf16.msra.mxu0 %v769
    %948 = vmatprep.subr.bf16.mxu0 %v773
    %949 = vmatpush1.bf16.msra.mxu0 %v772
    %950 = vmatprep.subr.bf16.mxu0 %v776
    %951 = vmatpush1.bf16.msra.mxu0 %v775
    %952 = vmatprep.subr.bf16.mxu0 %v779
    %953 = vmatpush1.bf16.msra.mxu0 %v778
    %954 = vmatprep.subr.bf16.mxu0 %v782
    %955 = vmatpush1.bf16.msra.mxu0 %v781
    %956 = vmatprep.subr.bf16.mxu0 %v785
    %957 = vmatpush1.bf16.msra.mxu0 %v784
    %958 = vmatprep.subr.bf16.mxu0 %v788
    %959 = vmatpush1.bf16.msra.mxu0 %v787
    %960 = vmatprep.subr.bf16.mxu0 %v791
    %961 = vmatpush1.bf16.msra.mxu0 %v790
    %962 = vmatprep.mubr.bf16.mxu0 %v231
    %963 = vmatmul.mubr.bf16.gmra.mrb[0].mxu0 %v230
    %v964 = vpop.f32.mrb[0].mxu0
    %v965 = vadd.f32 %v924, %v964
    %v966 = vpop.f32.mrb[0].mxu0
    %v967 = vadd.f32 %v926, %v966
    %v968 = vpop.f32.mrb[0].mxu0
    %v969 = vpop.f32.mrb[0].mxu0
    %970 = vdwg.mxu0
    %971 = vmatprep.subr.bf16.mxu0 0
    %972 = vmatpush1.bf16.msra.mxu0 %v699
    %973 = vmatprep.subr.bf16.mxu0 0
    %974 = vmatpush1.bf16.msra.mxu0 %v702
    %975 = vmatprep.subr.bf16.mxu0 0
    %976 = vmatpush1.bf16.msra.mxu0 %v705
    %977 = vmatprep.subr.bf16.mxu0 0
    %978 = vmatpush1.bf16.msra.mxu0 %v708
    %979 = vmatprep.subr.bf16.mxu0 0
    %980 = vmatpush1.bf16.msra.mxu0 %v711
    %981 = vmatprep.subr.bf16.mxu0 0
    %982 = vmatpush1.bf16.msra.mxu0 %v714
    %983 = vmatprep.subr.bf16.mxu0 0
    %984 = vmatpush1.bf16.msra.mxu0 %v717
    %985 = vmatprep.subr.bf16.mxu0 0
    %986 = vmatpush1.bf16.msra.mxu0 %v720
    %987 = vmatprep.subr.bf16.mxu0 0
    %988 = vmatpush1.bf16.msra.mxu0 %v723
    %989 = vmatprep.subr.bf16.mxu0 0
    %990 = vmatpush1.bf16.msra.mxu0 %v726
    %991 = vmatprep.subr.bf16.mxu0 0
    %992 = vmatpush1.bf16.msra.mxu0 %v729
    %993 = vmatprep.subr.bf16.mxu0 0
    %994 = vmatpush1.bf16.msra.mxu0 %v732
    %995 = vmatprep.subr.bf16.mxu0 0
    %996 = vmatpush1.bf16.msra.mxu0 %v735
    %997 = vmatprep.subr.bf16.mxu0 0
    %998 = vmatpush1.bf16.msra.mxu0 %v738
    %999 = vmatprep.subr.bf16.mxu0 0
    %1000 = vmatpush1.bf16.msra.mxu0 %v741
    %1001 = vmatprep.subr.bf16.mxu0 0
    %1002 = vmatpush1.bf16.msra.mxu0 %v744
    %1003 = vmatprep.mubr.bf16.mxu0 %v229
    %1004 = vmatmul.mubr.bf16.gmra.mrb[0].mxu0 %v228
    %v1005 = vpop.f32.mrb[0].mxu0
    %v1006 = vadd.f32 %v373, %v1005
    %v1007 = vpop.f32.mrb[0].mxu0
    %v1008 = vpop.f32.mrb[0].mxu0
    %v1009 = vpop.f32.mrb[0].mxu0
    %1010 = vdwg.mxu0
    %1011 = vmatprep.subr.bf16.mxu0 0
    %1012 = vmatpush1.bf16.msra.mxu0 %v747
    %1013 = vmatprep.subr.bf16.mxu0 0
    %1014 = vmatpush1.bf16.msra.mxu0 %v750
    %1015 = vmatprep.subr.bf16.mxu0 0
    %1016 = vmatpush1.bf16.msra.mxu0 %v753
    %1017 = vmatprep.subr.bf16.mxu0 0
    %1018 = vmatpush1.bf16.msra.mxu0 %v756
    %1019 = vmatprep.subr.bf16.mxu0 0
    %1020 = vmatpush1.bf16.msra.mxu0 %v759
    %1021 = vmatprep.subr.bf16.mxu0 0
    %1022 = vmatpush1.bf16.msra.mxu0 %v762
    %1023 = vmatprep.subr.bf16.mxu0 0
    %1024 = vmatpush1.bf16.msra.mxu0 %v765
    %1025 = vmatprep.subr.bf16.mxu0 0
    %1026 = vmatpush1.bf16.msra.mxu0 %v768
    %1027 = vmatprep.subr.bf16.mxu0 0
    %1028 = vmatpush1.bf16.msra.mxu0 %v771
    %1029 = vmatprep.subr.bf16.mxu0 0
    %1030 = vmatpush1.bf16.msra.mxu0 %v774
    %1031 = vmatprep.subr.bf16.mxu0 0
    %1032 = vmatpush1.bf16.msra.mxu0 %v777
    %1033 = vmatprep.subr.bf16.mxu0 0
    %1034 = vmatpush1.bf16.msra.mxu0 %v780
    %1035 = vmatprep.subr.bf16.mxu0 0
    %1036 = vmatpush1.bf16.msra.mxu0 %v783
    %1037 = vmatprep.subr.bf16.mxu0 0
    %1038 = vmatpush1.bf16.msra.mxu0 %v786
    %1039 = vmatprep.subr.bf16.mxu0 0
    %1040 = vmatpush1.bf16.msra.mxu0 %v789
    %1041 = vmatprep.subr.bf16.mxu0 0
    %1042 = vmatpush1.bf16.msra.mxu0 %v792
    %1043 = vmatprep.mubr.bf16.mxu0 %v231
    %1044 = vmatmul.mubr.bf16.gmra.mrb[0].mxu0 %v230
    %v1045 = vpop.f32.mrb[0].mxu0
    %v1046 = vadd.f32 %v1006, %v1045
    %v1047 = vpop.f32.mrb[0].mxu0
    %v1048 = vpop.f32.mrb[0].mxu0
    %v1049 = vpop.f32.mrb[0].mxu0
    %1050 = vdwg.mxu0
    %v1051 = vmax.f32 %v965, 0.0
    %v1052 = vmax.f32 %v967, 0.0
    %v1053 = vmax.f32 %v1046, 0.0
    %v1054 = vpack.c.bf16 %v1051, %v1051
    %v1055 = vpack.c.bf16 %v1052, %v1052
    %v1056 = vpack.c.bf16 %v1053, %v1053
    %v1057 = vld [vmem:[%s7] sm:$0xf]
    %v1058 = vld [vmem:[%s7 + $0x4] sm:$0xf]
    %v1059 = vld [vmem:[%s7 + $0x8] sm:$0xf]
    %v1060 = vld [vmem:[%s7 + $0xc] sm:$0xf]
    %v1061 = vld [vmem:[%s7 + $0x10] sm:$0xf]
    %v1062 = vld [vmem:[%s7 + $0x14] sm:$0xf]
    %v1063 = vld [vmem:[%s7 + $0x18] sm:$0xf]
    %v1064 = vld [vmem:[%s7 + $0x1c] sm:$0xf]
    %v1065 = vld [vmem:[%s7 + $0x20] sm:$0xf]
    %v1066 = vld [vmem:[%s7 + $0x24] sm:$0xf]
    %v1067 = vld [vmem:[%s7 + $0x28] sm:$0xf]
    %v1068 = vld [vmem:[%s7 + $0x2c] sm:$0xf]
    %v1069 = vld [vmem:[%s7 + $0x30] sm:$0xf]
    %v1070 = vld [vmem:[%s7 + $0x34] sm:$0xf]
    %v1071 = vld [vmem:[%s7 + $0x38] sm:$0xf]
    %v1072 = vld [vmem:[%s7 + $0x3c] sm:$0xf]
    %v1073 = vld [vmem:[%s7 + $0x40] sm:$0xf]
    %v1074 = vld [vmem:[%s7 + $0x44] sm:$0xf]
    %v1075 = vld [vmem:[%s7 + $0x48] sm:$0xf]
    %v1076 = vld [vmem:[%s7 + $0x4c] sm:$0xf]
    %v1077 = vld [vmem:[%s7 + $0x50] sm:$0xf]
    %v1078 = vld [vmem:[%s7 + $0x54] sm:$0xf]
    %v1079 = vld [vmem:[%s7 + $0x58] sm:$0xf]
    %v1080 = vld [vmem:[%s7 + $0x5c] sm:$0xf]
    %v1081 = vld [vmem:[%s7 + $0x60] sm:$0xf]
    %v1082 = vld [vmem:[%s7 + $0x64] sm:$0xf]
    %v1083 = vld [vmem:[%s7 + $0x68] sm:$0xf]
    %v1084 = vld [vmem:[%s7 + $0x6c] sm:$0xf]
    %v1085 = vld [vmem:[%s7 + $0x70] sm:$0xf]
    %v1086 = vld [vmem:[%s7 + $0x74] sm:$0xf]
    %v1087 = vld [vmem:[%s7 + $0x78] sm:$0xf]
    %v1088 = vld [vmem:[%s7 + $0x7c] sm:$0xf]
    %v1089 = vld [vmem:[%s7 + $0x80] sm:$0xf]
    %v1090 = vld [vmem:[%s7 + $0x84] sm:$0xf]
    %v1091 = vld [vmem:[%s7 + $0x88] sm:$0xf]
    %v1092 = vld [vmem:[%s7 + $0x8c] sm:$0xf]
    %v1093 = vld [vmem:[%s7 + $0x90] sm:$0xf]
    %v1094 = vld [vmem:[%s7 + $0x94] sm:$0xf]
    %v1095 = vld [vmem:[%s7 + $0x98] sm:$0xf]
    %v1096 = vld [vmem:[%s7 + $0x9c] sm:$0xf]
    %v1097 = vld [vmem:[%s7 + $0xa0] sm:$0xf]
    %v1098 = vld [vmem:[%s7 + $0xa4] sm:$0xf]
    %v1099 = vld [vmem:[%s7 + $0xa8] sm:$0xf]
    %v1100 = vld [vmem:[%s7 + $0xac] sm:$0xf]
    %v1101 = vld [vmem:[%s7 + $0xb0] sm:$0xf]
    %v1102 = vld [vmem:[%s7 + $0xb4] sm:$0xf]
    %v1103 = vld [vmem:[%s7 + $0xb8] sm:$0xf]
    %v1104 = vld [vmem:[%s7 + $0xbc] sm:$0xf]
    %v1105 = vld [vmem:[%s8] sm:$0x1]
    %v1107 = vlaneseq
    %v1108 = vshrl.u32 %v1107, 7
    %v1109 = vsub.s32 0, %v1108
    %v1110 = vrot.slane %v1105, %v1109
    %v1160 = vunpack.c.l.b16 %v1057
    %v1161 = vunpack.c.l.b16 %v1058
    %v1162 = vunpack.c.l.b16 %v1059
    %v1163 = vunpack.c.l.b16 %v1060
    %v1164 = vunpack.c.l.b16 %v1061
    %v1165 = vunpack.c.l.b16 %v1062
    %v1166 = vunpack.c.l.b16 %v1063
    %v1167 = vunpack.c.l.b16 %v1064
    %v1168 = vunpack.c.l.b16 %v1065
    %v1169 = vunpack.c.l.b16 %v1066
    %v1170 = vunpack.c.l.b16 %v1067
    %v1171 = vunpack.c.l.b16 %v1068
    %v1172 = vunpack.c.l.b16 %v1069
    %v1173 = vunpack.c.l.b16 %v1070
    %v1174 = vunpack.c.l.b16 %v1071
    %v1175 = vunpack.c.l.b16 %v1072
    %v1176 = vunpack.c.l.b16 %v1073
    %v1177 = vunpack.c.l.b16 %v1074
    %v1178 = vunpack.c.l.b16 %v1075
    %v1179 = vunpack.c.l.b16 %v1076
    %v1180 = vunpack.c.l.b16 %v1077
    %v1181 = vunpack.c.l.b16 %v1078
    %v1182 = vunpack.c.l.b16 %v1079
    %v1183 = vunpack.c.l.b16 %v1080
    %v1184 = vunpack.c.l.b16 %v1081
    %v1185 = vunpack.c.l.b16 %v1082
    %v1186 = vunpack.c.l.b16 %v1083
    %v1187 = vunpack.c.l.b16 %v1084
    %v1188 = vunpack.c.l.b16 %v1085
    %v1189 = vunpack.c.l.b16 %v1086
    %v1190 = vunpack.c.l.b16 %v1087
    %v1191 = vunpack.c.l.b16 %v1088
    %v1192 = vunpack.c.l.b16 %v1089
    %v1193 = vunpack.c.l.b16 %v1090
    %v1194 = vunpack.c.l.b16 %v1091
    %v1195 = vunpack.c.l.b16 %v1092
    %v1196 = vunpack.c.l.b16 %v1093
    %v1197 = vunpack.c.l.b16 %v1094
    %v1198 = vunpack.c.l.b16 %v1095
    %v1199 = vunpack.c.l.b16 %v1096
    %v1200 = vunpack.c.l.b16 %v1097
    %v1201 = vunpack.c.l.b16 %v1098
    %v1202 = vunpack.c.l.b16 %v1099
    %v1203 = vunpack.c.l.b16 %v1100
    %v1204 = vunpack.c.l.b16 %v1101
    %v1205 = vunpack.c.l.b16 %v1102
    %v1206 = vunpack.c.l.b16 %v1103
    %v1207 = vunpack.c.l.b16 %v1104
    %v1208 = vpack.c.b16 %v1161, %v1160
    %v1209 = vpack.c.b16 %v1163, %v1162
    %v1210 = vpack.c.b16 %v1165, %v1164
    %v1211 = vpack.c.b16 %v1167, %v1166
    %v1212 = vpack.c.b16 %v1169, %v1168
    %v1213 = vpack.c.b16 %v1171, %v1170
    %v1214 = vpack.c.b16 %v1173, %v1172
    %v1215 = vpack.c.b16 %v1175, %v1174
    %v1216 = vpack.c.b16 %v1177, %v1176
    %v1217 = vpack.c.b16 %v1179, %v1178
    %v1218 = vpack.c.b16 %v1181, %v1180
    %v1219 = vpack.c.b16 %v1183, %v1182
    %v1220 = vpack.c.b16 %v1185, %v1184
    %v1221 = vpack.c.b16 %v1187, %v1186
    %v1222 = vpack.c.b16 %v1189, %v1188
    %v1223 = vpack.c.b16 %v1191, %v1190
    %v1224 = vpack.c.b16 %v1193, %v1192
    %v1225 = vpack.c.b16 %v1195, %v1194
    %v1226 = vpack.c.b16 %v1197, %v1196
    %v1227 = vpack.c.b16 %v1199, %v1198
    %v1228 = vpack.c.b16 %v1201, %v1200
    %v1229 = vpack.c.b16 %v1203, %v1202
    %v1230 = vpack.c.b16 %v1205, %v1204
    %v1231 = vpack.c.b16 %v1207, %v1206
    %1256 = vmatprep.subr.bf16.mxu0 0
    %1257 = vmatpush1.bf16.msra.mxu0 %v1208
    %1258 = vmatprep.subr.bf16.mxu0 0
    %1259 = vmatpush1.bf16.msra.mxu0 %v1209
    %1260 = vmatprep.subr.bf16.mxu0 0
    %1261 = vmatpush1.bf16.msra.mxu0 %v1210
    %1262 = vmatprep.subr.bf16.mxu0 0
    %1263 = vmatpush1.bf16.msra.mxu0 %v1211
    %1264 = vmatprep.subr.bf16.mxu0 0
    %1265 = vmatpush1.bf16.msra.mxu0 %v1212
    %1266 = vmatprep.subr.bf16.mxu0 0
    %1267 = vmatpush1.bf16.msra.mxu0 %v1213
    %1268 = vmatprep.subr.bf16.mxu0 0
    %1269 = vmatpush1.bf16.msra.mxu0 %v1214
    %1270 = vmatprep.subr.bf16.mxu0 0
    %1271 = vmatpush1.bf16.msra.mxu0 %v1215
    %1272 = vmatprep.subr.bf16.mxu0 0
    %1273 = vmatpush1.bf16.msra.mxu0 %v1216
    %1274 = vmatprep.subr.bf16.mxu0 0
    %1275 = vmatpush1.bf16.msra.mxu0 %v1217
    %1276 = vmatprep.subr.bf16.mxu0 0
    %1277 = vmatpush1.bf16.msra.mxu0 %v1218
    %1278 = vmatprep.subr.bf16.mxu0 0
    %1279 = vmatpush1.bf16.msra.mxu0 %v1219
    %1280 = vmatprep.subr.bf16.mxu0 0
    %1281 = vmatpush1.bf16.msra.mxu0 %v1220
    %1282 = vmatprep.subr.bf16.mxu0 0
    %1283 = vmatpush1.bf16.msra.mxu0 %v1221
    %1284 = vmatprep.subr.bf16.mxu0 0
    %1285 = vmatpush1.bf16.msra.mxu0 %v1222
    %1286 = vmatprep.subr.bf16.mxu0 0
    %1287 = vmatpush1.bf16.msra.mxu0 %v1223
    %1288 = vmatprep.mubr.bf16.mxu0 %v1055
    %1289 = vmatmul.mubr.bf16.gmra.mrb[0].mxu0 %v1054
    %v1290 = vpop.f32.mrb[0].mxu0
    %v1291 = vadd.f32 %v1110, %v1290
    %v1292 = vpop.f32.mrb[0].mxu0
    %v1293 = vpop.f32.mrb[0].mxu0
    %v1294 = vpop.f32.mrb[0].mxu0
    %1295 = vdwg.mxu0
    %1296 = vmatprep.subr.bf16.mxu0 0
    %1297 = vmatpush1.bf16.msra.mxu0 %v1224
    %1298 = vmatprep.subr.bf16.mxu0 0
    %1299 = vmatpush1.bf16.msra.mxu0 %v1225
    %1300 = vmatprep.subr.bf16.mxu0 0
    %1301 = vmatpush1.bf16.msra.mxu0 %v1226
    %1302 = vmatprep.subr.bf16.mxu0 0
    %1303 = vmatpush1.bf16.msra.mxu0 %v1227
    %1304 = vmatprep.subr.bf16.mxu0 0
    %1305 = vmatpush1.bf16.msra.mxu0 %v1228
    %1306 = vmatprep.subr.bf16.mxu0 0
    %1307 = vmatpush1.bf16.msra.mxu0 %v1229
    %1308 = vmatprep.subr.bf16.mxu0 0
    %1309 = vmatpush1.bf16.msra.mxu0 %v1230
    %1310 = vmatprep.subr.bf16.mxu0 0
    %1311 = vmatpush1.bf16.msra.mxu0 %v1231
    %1312 = vmatprep.subr.bf16.mxu0 0
    %1313 = vmatpush1.bf16.msra.mxu0 0
    %1314 = vmatprep.subr.bf16.mxu0 0
    %1315 = vmatpush1.bf16.msra.mxu0 0
    %1316 = vmatprep.subr.bf16.mxu0 0
    %1317 = vmatpush1.bf16.msra.mxu0 0
    %1318 = vmatprep.subr.bf16.mxu0 0
    %1319 = vmatpush1.bf16.msra.mxu0 0
    %1320 = vmatprep.subr.bf16.mxu0 0
    %1321 = vmatpush1.bf16.msra.mxu0 0
    %1322 = vmatprep.subr.bf16.mxu0 0
    %1323 = vmatpush1.bf16.msra.mxu0 0
    %1324 = vmatprep.subr.bf16.mxu0 0
    %1325 = vmatpush1.bf16.msra.mxu0 0
    %1326 = vmatprep.subr.bf16.mxu0 0
    %1327 = vmatpush1.bf16.msra.mxu0 0
    %1328 = vmatprep.mubr.bf16.mxu0 0
    %1329 = vmatmul.mubr.bf16.gmra.mrb[0].mxu0 %v1056
    %v1330 = vpop.f32.mrb[0].mxu0
    %v1331 = vadd.f32 %v1291, %v1330
    %v1332 = vpop.f32.mrb[0].mxu0
    %v1333 = vpop.f32.mrb[0].mxu0
    %v1334 = vpop.f32.mrb[0].mxu0
    %1335 = vdwg.mxu0
    %1336 = vst [vmem:[#allocation2] sm:$0xff] %v1331
    // Predicated region
    $region38: #{actor_forward.1} parent=1 // pred_check
      _
    $region39: #{actor_forward.1} parent=1 // pred_check_branch
      %1338 = sbr.rel (0) target = $region41
    $region40: #{actor_forward.1} parent=1 // pred_region
      %s1340 = ssub.s32 128, 128
      %1341 = vsyncadd [#allocation3], %s1340
      %s1343 = sshll.u32 [#allocation2], 4
      %s1344 = int_to_ptr.vmem [resolvable:$true] %s1343
      %1346 = dma.vmem_to_hbm [thread:$0]  %s1344, 128, %s9, [#allocation3]
    $region41: #{actor_forward.1} parent=1 // pred_fallthru
      _
    // Predicated region
    $region42: #{actor_forward.1} parent=1 // pred_check
      _
    $region43: #{actor_forward.1} parent=1 // pred_check_branch
      %1348 = sbr.rel (0) target = $region45
    $region44: #{actor_forward.1} parent=1 // pred_region
      %1349 = dma.done [#allocation3], 128
    $region45: #{actor_forward.1} parent=1 // pred_fallthru
      _
    %1350 = vsyncpa [#allocation3], 1

</llo_original>
